<compile_context>
chip_gen: v5e
topology: v5e:2x2
jax: 0.10.0
libtpu: 0.0.40
codegen_flags: <defaults>
</compile_context>

<pallas_src>
import jax
import jax.numpy as jnp
from jax.experimental import pallas as pl
from jax.experimental.pallas import tpu as pltpu


# ----------------------------------------------------------------------------
# Kernels
# ----------------------------------------------------------------------------
def _avg_pool_grouped_kernel(x_ref, q_ref, o_ref):
    # x_ref: (TILE_ROWS, G*2*W) -- G window-rows (two image rows each, concat)
    # q_ref: (G*2*W, G*Wo)      -- block-diagonal pooling matrix (0.25 taps)
    # o_ref: (TILE_ROWS, G*Wo)
    x = x_ref[...].astype(q_ref.dtype)          # no-op for float inputs
    o_ref[...] = jnp.dot(
        x, q_ref[...], preferred_element_type=jnp.float32
    ).astype(o_ref.dtype)


def _avg_pool_wide_kernel(top_ref, bot_ref, q_ref, o_ref):
    # top_ref/bot_ref: (TILE_ROWS, 256) -- same width slice of image rows
    #                  2r / 2r+1 (two lane ranges of the same HBM array)
    # q_ref: (256, 128) pair-sum matrix (0.25 taps); o_ref: (TILE_ROWS, 128)
    s = top_ref[...].astype(q_ref.dtype) + bot_ref[...].astype(q_ref.dtype)
    o_ref[...] = jnp.dot(
        s, q_ref[...], preferred_element_type=jnp.float32
    ).astype(o_ref.dtype)


# ----------------------------------------------------------------------------
# Constant pooling matrices
# ----------------------------------------------------------------------------
def _pooling_matrix(W, group, dtype):
    """(group*2W, group*Wo) block-diagonal matrix implementing the 2x2 mean."""
    Wo = W // 2
    l = jax.lax.broadcasted_iota(jnp.int32, (2 * W, Wo), 0)
    k = jax.lax.broadcasted_iota(jnp.int32, (2 * W, Wo), 1)
    q = jnp.where((l % W) // 2 == k, 0.25, 0.0).astype(dtype)
    if group > 1:
        q = jnp.kron(jnp.eye(group, dtype=dtype), q)
    return q


def _pair_matrix(tw_out, dtype):
    """(2*tw_out, tw_out) matrix: out[k] = 0.25*(in[2k] + in[2k+1])."""
    l = jax.lax.broadcasted_iota(jnp.int32, (2 * tw_out, tw_out), 0)
    k = jax.lax.broadcasted_iota(jnp.int32, (2 * tw_out, tw_out), 1)
    return jnp.where(l // 2 == k, 0.25, 0.0).astype(dtype)


# ----------------------------------------------------------------------------
# Sizing heuristics
# ----------------------------------------------------------------------------
_pad128 = lambda n: -(-n // 128) * 128


def _vmem_limit_bytes():
    """Generation-aware scoped-VMEM limit (safe on v5e/v6e/v7x)."""
    phys = 64 * 1024 * 1024                    # conservative default (v7x / TC)
    try:
        phys = int(getattr(pltpu.get_tpu_info(), "vmem_capacity_bytes", phys))
    except Exception:
        pass
    return max(16 * 1024 * 1024, min(64 * 1024 * 1024, phys // 2))


def _choose_group(n_rows, Wo, lane_target=128):
    """Window-rows merged per matrix row -> output lane width near 128."""
    if Wo >= lane_target:
        return 1
    target = -(-lane_target // Wo)             # smallest G with G*Wo >= target
    hi = min(n_rows, 4 * target)
    divs = [g for g in range(1, hi + 1) if n_rows % g == 0]
    for g in divs:                             # prefer exactly lane-dense width
        if g >= target and (g * Wo) % 128 == 0:
            return g
    geq = [g for g in divs if g >= target]
    if geq:
        return geq[0]
    # TODO(synk): when n_rows has no divisor near 128/Wo we fall back to a
    # narrower (partially masked-store) output instead of padding rows.
    return divs[-1] if divs else 1


def _choose_tile_rows(m_rows, lane_widths, itemsize, vmem_limit, resident_bytes):
    """Rows per grid step, sized from the VMEM budget (double-buffered)."""
    pack = max(8, 32 // max(1, itemsize))      # 8 f32 / 16 bf16 / 32 int8
    per_row = 2 * sum(_pad128(w) for w in lane_widths) * itemsize
    budget = int(vmem_limit * 0.75) - resident_bytes
    tile = max(pack, budget // max(per_row, 1))
    if m_rows > 2 * pack:                      # keep >=2 blocks for v7x dual-TC
        tile = min(tile, -(-m_rows // 2))
    if tile >= m_rows:
        return m_rows                          # single (full) block on this axis
    return max(pack, (tile // pack) * pack)


# ----------------------------------------------------------------------------
# The two pooling paths
# ----------------------------------------------------------------------------
def _pool_grouped(x, N, C, Ho, Wo, qdt, itemsize, vmem_limit):
    """Wo < 128 (or unaligned): group window-rows so output lanes are dense."""
    W = 2 * Wo
    n_rows = N * C * Ho
    group = _choose_group(n_rows, Wo)
    m_rows = n_rows // group
    k_lanes = group * 2 * W
    n_lanes = group * Wo

    x2 = x.reshape(m_rows, k_lanes)            # contiguous merge: no HBM pass
    q = _pooling_matrix(W, group, qdt)
    q_bytes = 2 * _pad128(k_lanes) * _pad128(n_lanes) * q.dtype.itemsize

    tile_rows = _choose_tile_rows(m_rows, (k_lanes, n_lanes), itemsize,
                                  vmem_limit, q_bytes)
    grid = (pl.cdiv(m_rows, tile_rows),)
    cost = pl.CostEstimate(
        flops=2 * m_rows * k_lanes * n_lanes,
        transcendentals=0,
        bytes_accessed=(m_rows * k_lanes + m_rows * n_lanes) * itemsize
        + q.size * q.dtype.itemsize,
    )
    return pl.pallas_call(
        _avg_pool_grouped_kernel,
        out_shape=jax.ShapeDtypeStruct((m_rows, n_lanes), x.dtype),
        grid_spec=pltpu.PrefetchScalarGridSpec(
            num_scalar_prefetch=0,
            grid=grid,
            in_specs=[
                pl.BlockSpec((tile_rows, k_lanes), lambda i: (i, 0)),
                pl.BlockSpec((k_lanes, n_lanes), lambda i: (0, 0)),
            ],
            out_specs=pl.BlockSpec((tile_rows, n_lanes), lambda i: (i, 0)),
        ),
        compiler_params=pltpu.CompilerParams(
            dimension_semantics=("parallel",),
            vmem_limit_bytes=vmem_limit,
        ),
        cost_estimate=cost,
    )(x2, q)


def _pool_wide(x, N, C, Ho, Wo, qdt, itemsize, vmem_limit):
    """Wo >= 128 and Wo % 128 == 0: width-tiled, Q stays a tiny (256,128)."""
    W = 2 * Wo
    TW = 128                                   # output lanes per width block
    KW = 2 * TW                                # input lanes per block / image row
    nwj = Wo // TW                             # width blocks
    R = N * C * Ho

    x2 = x.reshape(R, 2 * W)                   # row r = [img row 2r | img row 2r+1]
    q = _pair_matrix(TW, qdt)
    q_bytes = 2 * KW * _pad128(TW) * q.dtype.itemsize

    tile_rows = _choose_tile_rows(R, (KW, KW, TW), itemsize, vmem_limit, q_bytes)
    grid = (pl.cdiv(R, tile_rows), nwj)
    cost = pl.CostEstimate(
        flops=2 * R * Wo * KW + R * W,
        transcendentals=0,
        bytes_accessed=(R * 2 * W + R * Wo) * itemsize
        + q.size * q.dtype.itemsize,
    )
    return pl.pallas_call(
        _avg_pool_wide_kernel,
        out_shape=jax.ShapeDtypeStruct((R, Wo), x.dtype),
        grid_spec=pltpu.PrefetchScalarGridSpec(
            num_scalar_prefetch=0,
            grid=grid,
            in_specs=[
                pl.BlockSpec((tile_rows, KW), lambda i, j: (i, j)),        # top row
                pl.BlockSpec((tile_rows, KW), lambda i, j: (i, j + nwj)),  # bottom row
                pl.BlockSpec((KW, TW), lambda i, j: (0, 0)),               # pair matrix
            ],
            out_specs=pl.BlockSpec((tile_rows, TW), lambda i, j: (i, j)),
        ),
        compiler_params=pltpu.CompilerParams(
            dimension_semantics=("parallel", "parallel"),
            vmem_limit_bytes=vmem_limit,
        ),
        cost_estimate=cost,
    )(x2, x2, q)


# ----------------------------------------------------------------------------
# Public entry point (forward of the PyTorch `Pooling` module)
# ----------------------------------------------------------------------------
@jax.jit
def avg_pool_2x2(x):
    """AvgPool2d(kernel_size=2, stride=2, padding=0) on NCHW input."""
    N, C, H, W = x.shape
    Ho, Wo = H // 2, W // 2
    assert Ho > 0 and Wo > 0, "input smaller than the 2x2 pooling window"
    if H % 2 or W % 2:                         # PyTorch floors odd dims
        x = x[:, :, : 2 * Ho, : 2 * Wo]

    itemsize = x.dtype.itemsize
    qdt = x.dtype if jnp.issubdtype(x.dtype, jnp.floating) else jnp.float32
    vmem_limit = _vmem_limit_bytes()

    if Wo >= 128 and Wo % 128 == 0:
        out = _pool_wide(x, N, C, Ho, Wo, qdt, itemsize, vmem_limit)
    else:
        # TODO(synk): for very large W with Wo >= 128 not a multiple of 128 the
        # grouped path's dense Q grows with W; width-tile that case too.
        out = _pool_grouped(x, N, C, Ho, Wo, qdt, itemsize, vmem_limit)
    return out.reshape(N, C, Ho, Wo)


# ----------------------------------------------------------------------------
# Self-test
# ----------------------------------------------------------------------------
if __name__ == "__main__":
    key = jax.random.PRNGKey(0)

    def ref_pool(x):
        N, C, H, W = x.shape
        Ho, Wo = H // 2, W // 2
        xr = x[:, :, : 2 * Ho, : 2 * Wo]
        return xr.reshape(N, C, Ho, 2, Wo, 2).mean(axis=(3, 5))

    shapes = [
        (2, 4, 16, 16),   # spec-sized input -> grouped (narrow-Wo) path
        (1, 2, 8, 256),   # wide-Wo path (Wo % 128 == 0)
        (2, 3, 9, 14),    # odd H/W -> PyTorch floor behaviour
    ]
    for i, shp in enumerate(shapes):
        k = jax.random.fold_in(key, i)
        x = jax.random.normal(k, shp, dtype=jnp.float32)
        y = jax.block_until_ready(avg_pool_2x2(x))
        r = ref_pool(x)
        assert y.shape == r.shape, (shp, y.shape, r.shape)
        assert jnp.allclose(y, r, atol=1e-5, rtol=1e-5), f"mismatch for {shp}"

    print("KERNEL_OK")
</pallas_src>

<mosaic_0001>
module attributes {stable_mosaic.version = 11 : i64} {
  func.func @_avg_pool_grouped_kernel(%arg0: i32, %arg1: memref<4x512xf32, #tpu.memory_space<vmem>>, %arg2: memref<512x128xf32, #tpu.memory_space<vmem>>, %arg3: memref<4x128xf32, #tpu.memory_space<vmem>>) attributes {dimension_semantics = [#tpu.dimension_semantics<parallel>], iteration_bounds = array<i64: 1>, scalar_prefetch = 0 : i64, scratch_operands = 0 : i64, tpu.core_type = #tpu.core_type<tc>, window_params = [{transform_indices = @transform_0, window_bounds = array<i64: 4, 512>}, {pipeline_mode = #tpu.pipeline_mode<synchronous>, transform_indices = @transform_1, window_bounds = array<i64: 512, 128>}, {transform_indices = @transform_2, window_bounds = array<i64: 4, 128>}]} {
    %c0 = arith.constant 0 : index
    %c0_0 = arith.constant 0 : index
    %0 = vector.load %arg1[%c0, %c0_0] : memref<4x512xf32, #tpu.memory_space<vmem>>, vector<4x512xf32>
    %c0_1 = arith.constant 0 : index
    %c0_2 = arith.constant 0 : index
    %1 = vector.load %arg2[%c0_1, %c0_2] : memref<512x128xf32, #tpu.memory_space<vmem>>, vector<512x128xf32>
    %cst = arith.constant dense<0.000000e+00> : vector<4x128xf32>
    %2 = tpu.matmul %0, %1, %cst {dimension_numbers = #tpu.dot_dimension_numbers<[1], [0], [0], [1], [0, 0, 1, 1], [], []>} : vector<4x512xf32>, vector<512x128xf32>, vector<4x128xf32> -> vector<4x128xf32>
    %c0_3 = arith.constant 0 : index
    %c0_4 = arith.constant 0 : index
    %3 = vector.load %arg3[%c0_3, %c0_4] : memref<4x128xf32, #tpu.memory_space<vmem>>, vector<4x128xf32>
    tpu.vector_store %arg3[%c0_3, %c0_4], %2 {strides = array<i32>} : memref<4x128xf32, #tpu.memory_space<vmem>>, vector<4x128xf32>,
    return
  }
  func.func @transform_0(%arg0: i32) -> (i32, i32) {
    %c0_i32 = arith.constant 0 : i32
    %c0_i32_0 = arith.constant 0 : i32
    return %arg0, %c0_i32 : i32, i32
  }
  func.func @transform_1(%arg0: i32) -> (i32, i32) {
    %c0_i32 = arith.constant 0 : i32
    %c0_i32_0 = arith.constant 0 : i32
    %c0_i32_1 = arith.constant 0 : i32
    return %c0_i32, %c0_i32_0 : i32, i32
  }
  func.func @transform_2(%arg0: i32) -> (i32, i32) {
    %c0_i32 = arith.constant 0 : i32
    %c0_i32_0 = arith.constant 0 : i32
    return %arg0, %c0_i32 : i32, i32
  }
}

</mosaic_0001>

<llo_original>
// kernel: avg_pool_2x2.1
$region0: #{avg_pool_2x2.1}
  #allocation0 [shape = 'u32[]', space=smem, size = 0x4, offset = 0x4, fixed_abs, tag = 'smem constant byte address 0x4 - core index']
  #allocation1 [shape = 'u32[72,128]{1,0:T(1,128)}', space=vmem, size = 0x9000, scoped, tag = 'internal scratch']
  %s0 = inlined_call_operand.vmem [shape: f32[4,512], index: 0, kind: input, shape index: {}]
  %s1 = inlined_call_operand.vmem [shape: f32[512,128], index: 1, kind: input, shape index: {}]
  %s2 = inlined_call_operand.vmem [shape: f32[4,128], index: 2, kind: output, shape index: {}]
  %s3 = sld [smem:[#allocation0]]
  $region18: #{avg_pool_2x2.1} parent=0
    _
  %s5 = ssub.s32 1, %s3
  %s6 = scalar_select 0, %s5, %s3
  // Predicated region
  $region2: #{avg_pool_2x2.1} parent=0 // pred_check
    _
  $region3: #{avg_pool_2x2.1} parent=0 // pred_check_branch
    %8 = sbr.rel (0) target = $region5
  $region4: #{avg_pool_2x2.1} parent=0 // pred_region
    _
  $region5: #{avg_pool_2x2.1} parent=0 // pred_fallthru
    _
  // Predicated region
  $region6: #{avg_pool_2x2.1} parent=0 // pred_check
    _
  $region7: #{avg_pool_2x2.1} parent=0 // pred_check_branch
    %10 = sbr.rel (0) target = $region9
  $region8: #{avg_pool_2x2.1} parent=0 // pred_region
    _
  $region9: #{avg_pool_2x2.1} parent=0 // pred_fallthru
    _
  %v11 = vld [vmem:[%s0] sm:$0xff]
  %v12 = vld [vmem:[%s0 + $0x8] sm:$0xff]
  %v13 = vld [vmem:[%s1] sm:$0xff]
  %v14 = vld [vmem:[%s1 + $0x8] sm:$0xff]
  %v15 = vld [vmem:[%s1 + $0x10] sm:$0xff]
  %v16 = vld [vmem:[%s1 + $0x18] sm:$0xff]
  %v17 = vld [vmem:[%s1 + $0x20] sm:$0xff]
  %v18 = vld [vmem:[%s1 + $0x28] sm:$0xff]
  %v19 = vld [vmem:[%s1 + $0x30] sm:$0xff]
  %v20 = vld [vmem:[%s1 + $0x38] sm:$0xff]
  %v21 = vld [vmem:[%s1 + $0x40] sm:$0xff]
  %v22 = vld [vmem:[%s1 + $0x48] sm:$0xff]
  %v23 = vld [vmem:[%s1 + $0x50] sm:$0xff]
  %v24 = vld [vmem:[%s1 + $0x58] sm:$0xff]
  %v25 = vld [vmem:[%s1 + $0x60] sm:$0xff]
  %v26 = vld [vmem:[%s1 + $0x68] sm:$0xff]
  %v27 = vld [vmem:[%s1 + $0x70] sm:$0xff]
  %v28 = vld [vmem:[%s1 + $0x78] sm:$0xff]
  %v29 = vld [vmem:[%s1 + $0x80] sm:$0xff]
  %v30 = vld [vmem:[%s1 + $0x88] sm:$0xff]
  %v31 = vld [vmem:[%s1 + $0x90] sm:$0xff]
  %v32 = vld [vmem:[%s1 + $0x98] sm:$0xff]
  %v33 = vld [vmem:[%s1 + $0xa0] sm:$0xff]
  %v34 = vld [vmem:[%s1 + $0xa8] sm:$0xff]
  %v35 = vld [vmem:[%s1 + $0xb0] sm:$0xff]
  %v36 = vld [vmem:[%s1 + $0xb8] sm:$0xff]
  %v37 = vld [vmem:[%s1 + $0xc0] sm:$0xff]
  %v38 = vld [vmem:[%s1 + $0xc8] sm:$0xff]
  %v39 = vld [vmem:[%s1 + $0xd0] sm:$0xff]
  %v40 = vld [vmem:[%s1 + $0xd8] sm:$0xff]
  %v41 = vld [vmem:[%s1 + $0xe0] sm:$0xff]
  %v42 = vld [vmem:[%s1 + $0xe8] sm:$0xff]
  %v43 = vld [vmem:[%s1 + $0xf0] sm:$0xff]
  %v44 = vld [vmem:[%s1 + $0xf8] sm:$0xff]
  %v45 = vld [vmem:[%s1 + $0x100] sm:$0xff]
  %v46 = vld [vmem:[%s1 + $0x108] sm:$0xff]
  %v47 = vld [vmem:[%s1 + $0x110] sm:$0xff]
  %v48 = vld [vmem:[%s1 + $0x118] sm:$0xff]
  %v49 = vld [vmem:[%s1 + $0x120] sm:$0xff]
  %v50 = vld [vmem:[%s1 + $0x128] sm:$0xff]
  %v51 = vld [vmem:[%s1 + $0x130] sm:$0xff]
  %v52 = vld [vmem:[%s1 + $0x138] sm:$0xff]
  %v53 = vld [vmem:[%s1 + $0x140] sm:$0xff]
  %v54 = vld [vmem:[%s1 + $0x148] sm:$0xff]
  %v55 = vld [vmem:[%s1 + $0x150] sm:$0xff]
  %v56 = vld [vmem:[%s1 + $0x158] sm:$0xff]
  %v57 = vld [vmem:[%s1 + $0x160] sm:$0xff]
  %v58 = vld [vmem:[%s1 + $0x168] sm:$0xff]
  %v59 = vld [vmem:[%s1 + $0x170] sm:$0xff]
  %v60 = vld [vmem:[%s1 + $0x178] sm:$0xff]
  %v61 = vld [vmem:[%s1 + $0x180] sm:$0xff]
  %v62 = vld [vmem:[%s1 + $0x188] sm:$0xff]
  %v63 = vld [vmem:[%s1 + $0x190] sm:$0xff]
  %v64 = vld [vmem:[%s1 + $0x198] sm:$0xff]
  %v65 = vld [vmem:[%s1 + $0x1a0] sm:$0xff]
  %v66 = vld [vmem:[%s1 + $0x1a8] sm:$0xff]
  %v67 = vld [vmem:[%s1 + $0x1b0] sm:$0xff]
  %v68 = vld [vmem:[%s1 + $0x1b8] sm:$0xff]
  %v69 = vld [vmem:[%s1 + $0x1c0] sm:$0xff]
  %v70 = vld [vmem:[%s1 + $0x1c8] sm:$0xff]
  %v71 = vld [vmem:[%s1 + $0x1d0] sm:$0xff]
  %v72 = vld [vmem:[%s1 + $0x1d8] sm:$0xff]
  %v73 = vld [vmem:[%s1 + $0x1e0] sm:$0xff]
  %v74 = vld [vmem:[%s1 + $0x1e8] sm:$0xff]
  %v75 = vld [vmem:[%s1 + $0x1f0] sm:$0xff]
  %v76 = vld [vmem:[%s1 + $0x1f8] sm:$0xff]
  %79 = vst [vmem:[#allocation1] ss:$2 sm:$0xff] %v11
  %s80 = scalar_lea.vmem [#allocation1], 16
  %81 = vst [vmem:[%s80] ss:$2 sm:$0xff] %v12
  %v82 = vld.sshfl [vmem:[#allocation1] sm:$0xff pattern:$0x75316420]
  %v83 = vld.sshfl [vmem:[#allocation1 + $0x8] sm:$0xff pattern:$0x75316420]
  %v84 = vld.sshfl [vmem:[#allocation1 + $0x10] sm:$0xff pattern:$0x75316420]
  %v85 = vld.sshfl [vmem:[#allocation1 + $0x18] sm:$0xff pattern:$0x75316420]
  %90 = vmatpush.msra.mxu0 %v28
  %91 = vmatpush.msra.mxu0 %v27
  %92 = vmatpush.msra.mxu0 %v26
  %93 = vmatpush.msra.mxu0 %v25
  %94 = vmatpush.msra.mxu0 %v24
  %95 = vmatpush.msra.mxu0 %v23
  %96 = vmatpush.msra.mxu0 %v22
  %97 = vmatpush.msra.mxu0 %v21
  %98 = vmatpush.msra.mxu0 %v20
  %99 = vmatpush.msra.mxu0 %v19
  %100 = vmatpush.msra.mxu0 %v18
  %101 = vmatpush.msra.mxu0 %v17
  %102 = vmatpush.msra.mxu0 %v16
  %103 = vmatpush.msra.mxu0 %v15
  %104 = vmatpush.msra.mxu0 %v14
  %105 = vmatpush.msra.mxu0 %v13
  %106 = vmatmul.f32.gmra.mxu0 %v82
  %v107 = vpop.f32.mrf.mxu0
  %v108 = vadd.f32 0.0, %v107
  %109 = vdwg.mxu0
  %110 = vmatpush.msra.mxu0 %v44
  %111 = vmatpush.msra.mxu0 %v43
  %112 = vmatpush.msra.mxu0 %v42
  %113 = vmatpush.msra.mxu0 %v41
  %114 = vmatpush.msra.mxu0 %v40
  %115 = vmatpush.msra.mxu0 %v39
  %116 = vmatpush.msra.mxu0 %v38
  %117 = vmatpush.msra.mxu0 %v37
  %118 = vmatpush.msra.mxu0 %v36
  %119 = vmatpush.msra.mxu0 %v35
  %120 = vmatpush.msra.mxu0 %v34
  %121 = vmatpush.msra.mxu0 %v33
  %122 = vmatpush.msra.mxu0 %v32
  %123 = vmatpush.msra.mxu0 %v31
  %124 = vmatpush.msra.mxu0 %v30
  %125 = vmatpush.msra.mxu0 %v29
  %126 = vmatmul.f32.gmra.mxu0 %v83
  %v127 = vpop.f32.mrf.mxu0
  %v128 = vadd.f32 %v108, %v127
  %129 = vdwg.mxu0
  %130 = vmatpush.msra.mxu0 %v60
  %131 = vmatpush.msra.mxu0 %v59
  %132 = vmatpush.msra.mxu0 %v58
  %133 = vmatpush.msra.mxu0 %v57
  %134 = vmatpush.msra.mxu0 %v56
  %135 = vmatpush.msra.mxu0 %v55
  %136 = vmatpush.msra.mxu0 %v54
  %137 = vmatpush.msra.mxu0 %v53
  %138 = vmatpush.msra.mxu0 %v52
  %139 = vmatpush.msra.mxu0 %v51
  %140 = vmatpush.msra.mxu0 %v50
  %141 = vmatpush.msra.mxu0 %v49
  %142 = vmatpush.msra.mxu0 %v48
  %143 = vmatpush.msra.mxu0 %v47
  %144 = vmatpush.msra.mxu0 %v46
  %145 = vmatpush.msra.mxu0 %v45
  %146 = vmatmul.f32.gmra.mxu0 %v84
  %v147 = vpop.f32.mrf.mxu0
  %v148 = vadd.f32 %v128, %v147
  %149 = vdwg.mxu0
  %150 = vmatpush.msra.mxu0 %v76
  %151 = vmatpush.msra.mxu0 %v75
  %152 = vmatpush.msra.mxu0 %v74
  %153 = vmatpush.msra.mxu0 %v73
  %154 = vmatpush.msra.mxu0 %v72
  %155 = vmatpush.msra.mxu0 %v71
  %156 = vmatpush.msra.mxu0 %v70
  %157 = vmatpush.msra.mxu0 %v69
  %158 = vmatpush.msra.mxu0 %v68
  %159 = vmatpush.msra.mxu0 %v67
  %160 = vmatpush.msra.mxu0 %v66
  %161 = vmatpush.msra.mxu0 %v65
  %162 = vmatpush.msra.mxu0 %v64
  %163 = vmatpush.msra.mxu0 %v63
  %164 = vmatpush.msra.mxu0 %v62
  %165 = vmatpush.msra.mxu0 %v61
  %166 = vmatmul.f32.gmra.mxu0 %v85
  %v167 = vpop.f32.mrf.mxu0
  %v168 = vadd.f32 %v148, %v167
  %169 = vdwg.mxu0
  %170 = vst [vmem:[%s2] sm:$0xf] %v168
  // Predicated region
  $region10: #{avg_pool_2x2.1} parent=0 // pred_check
    _
  $region11: #{avg_pool_2x2.1} parent=0 // pred_check_branch
    %172 = sbr.rel (0) target = $region13
  $region12: #{avg_pool_2x2.1} parent=0 // pred_region
    _
  $region13: #{avg_pool_2x2.1} parent=0 // pred_fallthru
    _
  // Predicated region
  $region14: #{avg_pool_2x2.1} parent=0 // pred_check
    _
  $region15: #{avg_pool_2x2.1} parent=0 // pred_check_branch
    %174 = sbr.rel (0) target = $region17
  $region16: #{avg_pool_2x2.1} parent=0 // pred_region
    _
  $region17: #{avg_pool_2x2.1} parent=0 // pred_fallthru
    _

</llo_original>
